<compile_context>
chip_gen: v5e
topology: v5e:2x2
jax: 0.10.0
libtpu: 0.0.40
codegen_flags: <defaults>
</compile_context>

<pallas_src>
import functools

import numpy as np
import jax
import jax.numpy as jnp
from jax import lax
from jax.experimental import pallas as pl
from jax.experimental.pallas import tpu as pltpu


def _info_nce_kernel(f_ref, loss_ref, *, inv_t, row_tile):
    # f_ref:    (B, NV, D) float32 — full feature block, resident in VMEM.
    # loss_ref: (TM, 1)    float32 — per-row CE loss for this row tile.
    B, NV, D = f_ref.shape
    TM = row_tile

    # --- F.normalize(features, dim=1): L2 norm over the n_views axis ---------
    # Work with rank-2 per-view slices; rsqrt (EUP) replaces sqrt + divide.
    views = [f_ref[:, v, :] for v in range(NV)]            # NV x (B, D)
    sq = views[0] * views[0]
    for v in range(1, NV):
        sq = sq + views[v] * views[v]
    inv_norm = lax.rsqrt(jnp.maximum(sq, 1e-24))           # == 1 / max(||x||, 1e-12)

    # --- anchor rows of this tile, with 1/temperature folded in --------------
    if TM == B:                                            # single-tile fast path
        base_row = 0
        anchor = views[0] * inv_norm * inv_t               # (B, D)
    else:                                                  # row-tiled path (large B)
        base_row = pl.multiple_of(pl.program_id(0) * TM, TM)
        a_v = [f_ref[pl.ds(base_row, TM), v, :] for v in range(NV)]
        sq_a = a_v[0] * a_v[0]
        for v in range(1, NV):
            sq_a = sq_a + a_v[v] * a_v[v]
        anchor = a_v[0] * lax.rsqrt(jnp.maximum(sq_a, 1e-24)) * inv_t  # (TM, D)

    # --- negative mask: column b of every view is negative for global row i
    #     iff b != i (identity-pattern compare; no integer modulo). -----------
    grow = base_row + lax.broadcasted_iota(jnp.int32, (TM, B), 0)
    col = lax.broadcasted_iota(jnp.int32, (TM, B), 1)
    neg = col != grow

    # --- per-view MXU matmuls + online masked logsumexp across views ---------
    m_i = jnp.full((TM, 1), -jnp.inf, dtype=jnp.float32)
    s_i = jnp.zeros((TM, 1), dtype=jnp.float32)
    first_neg = None
    for v in range(NV):
        rhs = views[v] * inv_norm                          # normalized view v, (B, D)
        sim = lax.dot_general(anchor, rhs,
                              dimension_numbers=(((1,), (1,)), ((), ())),
                              preferred_element_type=jnp.float32)   # (TM, B)
        if v == 0:
            # CE target is the first negative of the flattened (v*B + b) order:
            # column 0 for every row except global row 0, which uses column 1.
            gr = base_row + lax.broadcasted_iota(jnp.int32, (TM, 1), 0)
            first_neg = jnp.where(gr == 0, sim[:, 1:2], sim[:, 0:1])
        masked = jnp.where(neg, sim, -jnp.inf)             # exp(-inf) = 0 masks for free
        m_new = jnp.maximum(m_i, jnp.max(masked, axis=-1, keepdims=True))
        s_i = s_i * jnp.exp(m_i - m_new) + jnp.sum(
            jnp.exp(masked - m_new), axis=-1, keepdims=True)
        m_i = m_new

    # per-row cross-entropy loss; the mean over rows happens in the wrapper.
    loss_ref[...] = (m_i + jnp.log(s_i)) - first_neg


def _pick_row_tile(batch):
    if batch <= 256:
        return batch
    for tm in (256, 128, 64, 32, 16, 8):
        if batch % tm == 0:
            return tm
    return batch  # fall back to a single full-batch tile


@functools.partial(jax.jit, static_argnames=("temperature",))
def info_nce_loss_pallas(features, y=None, *, temperature=0.1):
    """features: (B, n_views, D).  `y` only feeds the dead-code weights branch of
    the reference module and is accepted but ignored."""
    del y
    features = features.astype(jnp.float32)
    B, NV, D = features.shape
    if B < 2:
        raise ValueError("InfoNCE requires batch_size >= 2")
    TM = _pick_row_tile(B)
    kernel = functools.partial(
        _info_nce_kernel, inv_t=float(1.0 / temperature), row_tile=TM)
    per_row = pl.pallas_call(
        kernel,
        out_shape=jax.ShapeDtypeStruct((B, 1), jnp.float32),
        grid=(B // TM,),
        in_specs=[pl.BlockSpec((B, NV, D), lambda i: (0, 0, 0))],  # resident RHS
        out_specs=pl.BlockSpec((TM, 1), lambda i: (i, 0)),
        compiler_params=pltpu.CompilerParams(
            dimension_semantics=("parallel",)),                    # megacore on v7x
    )(features)
    return jnp.mean(per_row)


class InfoNCE:
    """JAX/Pallas counterpart of the PyTorch InfoNCE module (no learnable params)."""

    def __init__(self, temperature=0.1, batch_size=64, n_views=5, alpha=1.5):
        self.temperature = temperature
        self.batch_size = batch_size
        self.n_views = n_views
        self.alpha = alpha  # only used by the dead weights branch in the reference

    def __call__(self, features, y):
        return info_nce_loss_pallas(features, y, temperature=self.temperature)


# ---------------------------------------------------------------------------
# Pure-numpy reference mirroring the PyTorch code path, for a correctness check.
# ---------------------------------------------------------------------------
def _info_nce_ref(features_np, temperature=0.1):
    f = np.asarray(features_np, dtype=np.float64)
    B, NV, D = f.shape
    nrm = np.sqrt((f * f).sum(axis=1, keepdims=True))
    fn = f / np.maximum(nrm, 1e-12)
    anchor = fn[:, 0, :]
    feats = fn.transpose(1, 0, 2).reshape(NV * B, D)
    logits = (anchor @ feats.T) / temperature               # (B, NV*B)
    col = np.arange(NV * B)[None, :] % B
    row = np.arange(B)[:, None]
    negs = logits[col != row].reshape(B, -1)                 # (B, NV*(B-1))
    m = negs.max(axis=1, keepdims=True)
    lse = m[:, 0] + np.log(np.exp(negs - m).sum(axis=1))
    return float(np.mean(lse - negs[:, 0]))


if __name__ == "__main__":
    key = jax.random.PRNGKey(0)
    B, NV, D = 8, 5, 128
    kf, ky = jax.random.split(key)
    features = jax.random.normal(kf, (B, NV, D), dtype=jnp.float32)
    # y has one entry per (anchor, view) pair (B * n_views), as implied by
    # weights[ones_indices] = y in the reference; it does not affect the loss.
    y = jax.random.uniform(ky, (B * NV,), dtype=jnp.float32) * 20.0

    module = InfoNCE(temperature=0.1, batch_size=B, n_views=NV)
    loss = jax.block_until_ready(module(features, y))

    ref = _info_nce_ref(np.asarray(features), temperature=0.1)
    assert jnp.isfinite(loss), loss
    assert jnp.allclose(loss, ref, rtol=1e-4, atol=1e-4), (float(loss), ref)

    print("KERNEL_OK")
</pallas_src>

<mosaic_0001>
module attributes {stable_mosaic.version = 11 : i64} {
  func.func @_info_nce_kernel(%arg0: i32, %arg1: memref<8x5x128xf32, #tpu.memory_space<vmem>>, %arg2: memref<8x1xf32, #tpu.memory_space<vmem>>) attributes {dimension_semantics = [#tpu.dimension_semantics<parallel>], iteration_bounds = array<i64: 1>, scalar_prefetch = 0 : i64, scratch_operands = 0 : i64, tpu.core_type = #tpu.core_type<tc>, window_params = [{pipeline_mode = #tpu.pipeline_mode<synchronous>, transform_indices = @transform_0, window_bounds = array<i64: 8, 5, 128>}, {transform_indices = @transform_1, window_bounds = array<i64: 8, 1>}]} {
    %c0 = arith.constant 0 : index
    %c0_0 = arith.constant 0 : index
    %c0_1 = arith.constant 0 : index
    %0 = vector.load %arg1[%c0, %c0_0, %c0_1] : memref<8x5x128xf32, #tpu.memory_space<vmem>>, vector<8x1x128xf32>
    %1 = vector.shape_cast %0 : vector<8x1x128xf32> to vector<8x128xf32>
    %c0_2 = arith.constant 0 : index
    %c1 = arith.constant 1 : index
    %c0_3 = arith.constant 0 : index
    %2 = vector.load %arg1[%c0_2, %c1, %c0_3] : memref<8x5x128xf32, #tpu.memory_space<vmem>>, vector<8x1x128xf32>
    %3 = vector.shape_cast %2 : vector<8x1x128xf32> to vector<8x128xf32>
    %c0_4 = arith.constant 0 : index
    %c2 = arith.constant 2 : index
    %c0_5 = arith.constant 0 : index
    %4 = vector.load %arg1[%c0_4, %c2, %c0_5] : memref<8x5x128xf32, #tpu.memory_space<vmem>>, vector<8x1x128xf32>
    %5 = vector.shape_cast %4 : vector<8x1x128xf32> to vector<8x128xf32>
    %c0_6 = arith.constant 0 : index
    %c3 = arith.constant 3 : index
    %c0_7 = arith.constant 0 : index
    %6 = vector.load %arg1[%c0_6, %c3, %c0_7] : memref<8x5x128xf32, #tpu.memory_space<vmem>>, vector<8x1x128xf32>
    %7 = vector.shape_cast %6 : vector<8x1x128xf32> to vector<8x128xf32>
    %c0_8 = arith.constant 0 : index
    %c4 = arith.constant 4 : index
    %c0_9 = arith.constant 0 : index
    %8 = vector.load %arg1[%c0_8, %c4, %c0_9] : memref<8x5x128xf32, #tpu.memory_space<vmem>>, vector<8x1x128xf32>
    %9 = vector.shape_cast %8 : vector<8x1x128xf32> to vector<8x128xf32>
    %10 = arith.mulf %1, %1 : vector<8x128xf32>
    %11 = arith.mulf %3, %3 : vector<8x128xf32>
    %12 = arith.addf %10, %11 : vector<8x128xf32>
    %13 = arith.mulf %5, %5 : vector<8x128xf32>
    %14 = arith.addf %12, %13 : vector<8x128xf32>
    %15 = arith.mulf %7, %7 : vector<8x128xf32>
    %16 = arith.addf %14, %15 : vector<8x128xf32>
    %17 = arith.mulf %9, %9 : vector<8x128xf32>
    %18 = arith.addf %16, %17 : vector<8x128xf32>
    %cst = arith.constant 1.000000e-24 : f32
    %19 = vector.broadcast %cst : f32 to vector<8x128xf32>
    %20 = arith.maximumf %18, %19 : vector<8x128xf32>
    %21 = math.rsqrt %20 : vector<8x128xf32>
    %22 = arith.mulf %1, %21 : vector<8x128xf32>
    %cst_10 = arith.constant 1.000000e+01 : f32
    %23 = vector.broadcast %cst_10 : f32 to vector<8x128xf32>
    %24 = arith.mulf %22, %23 : vector<8x128xf32>
    %25 = tpu.iota {dimensions = array<i32: 0>} : vector<8x8xi32>
    %c0_i32 = arith.constant 0 : i32
    %26 = vector.broadcast %c0_i32 : i32 to vector<8x8xi32>
    %27 = arith.addi %26, %25 : vector<8x8xi32>
    %28 = tpu.iota {dimensions = array<i32: 1>} : vector<8x8xi32>
    %29 = arith.cmpi ne, %28, %27 : vector<8x8xi32>
    %cst_11 = arith.constant 0xFF800000 : f32
    %30 = vector.broadcast %cst_11 : f32 to vector<8x1xf32>
    %cst_12 = arith.constant 0.000000e+00 : f32
    %31 = vector.broadcast %cst_12 : f32 to vector<8x1xf32>
    %32 = arith.mulf %1, %21 : vector<8x128xf32>
    %cst_13 = arith.constant dense<0.000000e+00> : vector<8x8xf32>
    %33 = tpu.matmul %24, %32, %cst_13 {dimension_numbers = #tpu.dot_dimension_numbers<[1], [1], [0], [0], [0, 0, 1, 0], [], []>} : vector<8x128xf32>, vector<8x128xf32>, vector<8x8xf32> -> vector<8x8xf32>
    %34 = tpu.iota {dimensions = array<i32: 0>} : vector<8x1xi32>
    %c0_i32_14 = arith.constant 0 : i32
    %35 = vector.broadcast %c0_i32_14 : i32 to vector<8x1xi32>
    %36 = arith.addi %35, %34 : vector<8x1xi32>
    %c0_i32_15 = arith.constant 0 : i32
    %37 = vector.broadcast %c0_i32_15 : i32 to vector<8x1xi32>
    %38 = arith.cmpi eq, %36, %37 : vector<8x1xi32>
    %39 = vector.extract_strided_slice %33 {offsets = [0, 1], sizes = [8, 1], strides = [1, 1]} : vector<8x8xf32> to vector<8x1xf32>
    %40 = vector.extract_strided_slice %33 {offsets = [0, 0], sizes = [8, 1], strides = [1, 1]} : vector<8x8xf32> to vector<8x1xf32>
    %41 = arith.select %38, %39, %40 : vector<8x1xi1>, vector<8x1xf32>
    %cst_16 = arith.constant 0xFF800000 : f32
    %42 = vector.broadcast %cst_16 : f32 to vector<8x8xf32>
    %43 = arith.select %29, %33, %42 : vector<8x8xi1>, vector<8x8xf32>
    %cst_17 = arith.constant dense<0xFF800000> : vector<8xf32>
    %44 = vector.multi_reduction <maximumf>, %43, %cst_17 [1] : vector<8x8xf32> to vector<8xf32>
    %45 = vector.shape_cast %44 : vector<8xf32> to vector<8x1xf32>
    %46 = arith.maximumf %30, %45 : vector<8x1xf32>
    %47 = arith.subf %30, %46 : vector<8x1xf32>
    %48 = math.exp %47 : vector<8x1xf32>
    %49 = arith.mulf %31, %48 : vector<8x1xf32>
    %50 = vector.broadcast %46 : vector<8x1xf32> to vector<8x8xf32>
    %51 = arith.subf %43, %50 : vector<8x8xf32>
    %52 = math.exp %51 : vector<8x8xf32>
    %cst_18 = arith.constant dense<0.000000e+00> : vector<8xf32>
    %53 = vector.multi_reduction <add>, %52, %cst_18 [1] : vector<8x8xf32> to vector<8xf32>
    %54 = vector.shape_cast %53 : vector<8xf32> to vector<8x1xf32>
    %55 = arith.addf %49, %54 : vector<8x1xf32>
    %56 = arith.mulf %3, %21 : vector<8x128xf32>
    %cst_19 = arith.constant dense<0.000000e+00> : vector<8x8xf32>
    %57 = tpu.matmul %24, %56, %cst_19 {dimension_numbers = #tpu.dot_dimension_numbers<[1], [1], [0], [0], [0, 0, 1, 0], [], []>} : vector<8x128xf32>, vector<8x128xf32>, vector<8x8xf32> -> vector<8x8xf32>
    %cst_20 = arith.constant 0xFF800000 : f32
    %58 = vector.broadcast %cst_20 : f32 to vector<8x8xf32>
    %59 = arith.select %29, %57, %58 : vector<8x8xi1>, vector<8x8xf32>
    %cst_21 = arith.constant dense<0xFF800000> : vector<8xf32>
    %60 = vector.multi_reduction <maximumf>, %59, %cst_21 [1] : vector<8x8xf32> to vector<8xf32>
    %61 = vector.shape_cast %60 : vector<8xf32> to vector<8x1xf32>
    %62 = arith.maximumf %46, %61 : vector<8x1xf32>
    %63 = arith.subf %46, %62 : vector<8x1xf32>
    %64 = math.exp %63 : vector<8x1xf32>
    %65 = arith.mulf %55, %64 : vector<8x1xf32>
    %66 = vector.broadcast %62 : vector<8x1xf32> to vector<8x8xf32>
    %67 = arith.subf %59, %66 : vector<8x8xf32>
    %68 = math.exp %67 : vector<8x8xf32>
    %cst_22 = arith.constant dense<0.000000e+00> : vector<8xf32>
    %69 = vector.multi_reduction <add>, %68, %cst_22 [1] : vector<8x8xf32> to vector<8xf32>
    %70 = vector.shape_cast %69 : vector<8xf32> to vector<8x1xf32>
    %71 = arith.addf %65, %70 : vector<8x1xf32>
    %72 = arith.mulf %5, %21 : vector<8x128xf32>
    %cst_23 = arith.constant dense<0.000000e+00> : vector<8x8xf32>
    %73 = tpu.matmul %24, %72, %cst_23 {dimension_numbers = #tpu.dot_dimension_numbers<[1], [1], [0], [0], [0, 0, 1, 0], [], []>} : vector<8x128xf32>, vector<8x128xf32>, vector<8x8xf32> -> vector<8x8xf32>
    %cst_24 = arith.constant 0xFF800000 : f32
    %74 = vector.broadcast %cst_24 : f32 to vector<8x8xf32>
    %75 = arith.select %29, %73, %74 : vector<8x8xi1>, vector<8x8xf32>
    %cst_25 = arith.constant dense<0xFF800000> : vector<8xf32>
    %76 = vector.multi_reduction <maximumf>, %75, %cst_25 [1] : vector<8x8xf32> to vector<8xf32>
    %77 = vector.shape_cast %76 : vector<8xf32> to vector<8x1xf32>
    %78 = arith.maximumf %62, %77 : vector<8x1xf32>
    %79 = arith.subf %62, %78 : vector<8x1xf32>
    %80 = math.exp %79 : vector<8x1xf32>
    %81 = arith.mulf %71, %80 : vector<8x1xf32>
    %82 = vector.broadcast %78 : vector<8x1xf32> to vector<8x8xf32>
    %83 = arith.subf %75, %82 : vector<8x8xf32>
    %84 = math.exp %83 : vector<8x8xf32>
    %cst_26 = arith.constant dense<0.000000e+00> : vector<8xf32>
    %85 = vector.multi_reduction <add>, %84, %cst_26 [1] : vector<8x8xf32> to vector<8xf32>
    %86 = vector.shape_cast %85 : vector<8xf32> to vector<8x1xf32>
    %87 = arith.addf %81, %86 : vector<8x1xf32>
    %88 = arith.mulf %7, %21 : vector<8x128xf32>
    %cst_27 = arith.constant dense<0.000000e+00> : vector<8x8xf32>
    %89 = tpu.matmul %24, %88, %cst_27 {dimension_numbers = #tpu.dot_dimension_numbers<[1], [1], [0], [0], [0, 0, 1, 0], [], []>} : vector<8x128xf32>, vector<8x128xf32>, vector<8x8xf32> -> vector<8x8xf32>
    %cst_28 = arith.constant 0xFF800000 : f32
    %90 = vector.broadcast %cst_28 : f32 to vector<8x8xf32>
    %91 = arith.select %29, %89, %90 : vector<8x8xi1>, vector<8x8xf32>
    %cst_29 = arith.constant dense<0xFF800000> : vector<8xf32>
    %92 = vector.multi_reduction <maximumf>, %91, %cst_29 [1] : vector<8x8xf32> to vector<8xf32>
    %93 = vector.shape_cast %92 : vector<8xf32> to vector<8x1xf32>
    %94 = arith.maximumf %78, %93 : vector<8x1xf32>
    %95 = arith.subf %78, %94 : vector<8x1xf32>
    %96 = math.exp %95 : vector<8x1xf32>
    %97 = arith.mulf %87, %96 : vector<8x1xf32>
    %98 = vector.broadcast %94 : vector<8x1xf32> to vector<8x8xf32>
    %99 = arith.subf %91, %98 : vector<8x8xf32>
    %100 = math.exp %99 : vector<8x8xf32>
    %cst_30 = arith.constant dense<0.000000e+00> : vector<8xf32>
    %101 = vector.multi_reduction <add>, %100, %cst_30 [1] : vector<8x8xf32> to vector<8xf32>
    %102 = vector.shape_cast %101 : vector<8xf32> to vector<8x1xf32>
    %103 = arith.addf %97, %102 : vector<8x1xf32>
    %104 = arith.mulf %9, %21 : vector<8x128xf32>
    %cst_31 = arith.constant dense<0.000000e+00> : vector<8x8xf32>
    %105 = tpu.matmul %24, %104, %cst_31 {dimension_numbers = #tpu.dot_dimension_numbers<[1], [1], [0], [0], [0, 0, 1, 0], [], []>} : vector<8x128xf32>, vector<8x128xf32>, vector<8x8xf32> -> vector<8x8xf32>
    %cst_32 = arith.constant 0xFF800000 : f32
    %106 = vector.broadcast %cst_32 : f32 to vector<8x8xf32>
    %107 = arith.select %29, %105, %106 : vector<8x8xi1>, vector<8x8xf32>
    %cst_33 = arith.constant dense<0xFF800000> : vector<8xf32>
    %108 = vector.multi_reduction <maximumf>, %107, %cst_33 [1] : vector<8x8xf32> to vector<8xf32>
    %109 = vector.shape_cast %108 : vector<8xf32> to vector<8x1xf32>
    %110 = arith.maximumf %94, %109 : vector<8x1xf32>
    %111 = arith.subf %94, %110 : vector<8x1xf32>
    %112 = math.exp %111 : vector<8x1xf32>
    %113 = arith.mulf %103, %112 : vector<8x1xf32>
    %114 = vector.broadcast %110 : vector<8x1xf32> to vector<8x8xf32>
    %115 = arith.subf %107, %114 : vector<8x8xf32>
    %116 = math.exp %115 : vector<8x8xf32>
    %cst_34 = arith.constant dense<0.000000e+00> : vector<8xf32>
    %117 = vector.multi_reduction <add>, %116, %cst_34 [1] : vector<8x8xf32> to vector<8xf32>
    %118 = vector.shape_cast %117 : vector<8xf32> to vector<8x1xf32>
    %119 = arith.addf %113, %118 : vector<8x1xf32>
    %120 = math.log %119 : vector<8x1xf32>
    %121 = arith.addf %110, %120 : vector<8x1xf32>
    %122 = arith.subf %121, %41 : vector<8x1xf32>
    %c0_35 = arith.constant 0 : index
    %c0_36 = arith.constant 0 : index
    %123 = vector.load %arg2[%c0_35, %c0_36] : memref<8x1xf32, #tpu.memory_space<vmem>>, vector<8x1xf32>
    tpu.vector_store %arg2[%c0_35, %c0_36], %122 {strides = array<i32>} : memref<8x1xf32, #tpu.memory_space<vmem>>, vector<8x1xf32>,
    return
  }
  func.func @transform_0(%arg0: i32) -> (i32, i32, i32) {
    %c0_i32 = arith.constant 0 : i32
    %c0_i32_0 = arith.constant 0 : i32
    %c0_i32_1 = arith.constant 0 : i32
    %c0_i32_2 = arith.constant 0 : i32
    return %c0_i32, %c0_i32_0, %c0_i32_1 : i32, i32, i32
  }
  func.func @transform_1(%arg0: i32) -> (i32, i32) {
    %c0_i32 = arith.constant 0 : i32
    %c0_i32_0 = arith.constant 0 : i32
    return %arg0, %c0_i32 : i32, i32
  }
}

</mosaic_0001>

<llo_original>
// kernel: info_nce_loss_pallas.1
$region0: #{info_nce_loss_pallas.1}
  #allocation0 [shape = 'u32[]', space=smem, size = 0x4, offset = 0x4, fixed_abs, tag = 'smem constant byte address 0x4 - core index']
  #allocation1 [shape = 'u32[72,128]{1,0:T(1,128)}', space=vmem, size = 0x9000, scoped, tag = 'internal scratch']
  %s0 = inlined_call_operand.vmem [shape: f32[8,5,128], index: 0, kind: input, shape index: {}]
  %s1 = inlined_call_operand.vmem [shape: f32[8,1], index: 1, kind: output, shape index: {}]
  %s2 = sld [smem:[#allocation0]]
  $region14: #{info_nce_loss_pallas.1} parent=0
    _
  %s4 = ssub.s32 1, %s2
  %s5 = scalar_select 0, %s4, %s2
  // Predicated region
  $region2: #{info_nce_loss_pallas.1} parent=0 // pred_check
    _
  $region3: #{info_nce_loss_pallas.1} parent=0 // pred_check_branch
    %7 = sbr.rel (0) target = $region5
  $region4: #{info_nce_loss_pallas.1} parent=0 // pred_region
    _
  $region5: #{info_nce_loss_pallas.1} parent=0 // pred_fallthru
    _
  %v8 = vld [vmem:[%s0] sm:$0x1]
  %v9 = vld [vmem:[%s0 + $0x8] sm:$0x1]
  %v10 = vld [vmem:[%s0 + $0x10] sm:$0x1]
  %v11 = vld [vmem:[%s0 + $0x18] sm:$0x1]
  %v12 = vld [vmem:[%s0 + $0x20] sm:$0x1]
  %v13 = vld [vmem:[%s0 + $0x28] sm:$0x1]
  %v14 = vld [vmem:[%s0 + $0x30] sm:$0x1]
  %v15 = vld [vmem:[%s0 + $0x38] sm:$0x1]
  %v16 = vld [vmem:[%s0 + $0x1] sm:$0x1]
  %v17 = vld [vmem:[%s0 + $0x9] sm:$0x1]
  %v18 = vld [vmem:[%s0 + $0x11] sm:$0x1]
  %v19 = vld [vmem:[%s0 + $0x19] sm:$0x1]
  %v20 = vld [vmem:[%s0 + $0x21] sm:$0x1]
  %v21 = vld [vmem:[%s0 + $0x29] sm:$0x1]
  %v22 = vld [vmem:[%s0 + $0x31] sm:$0x1]
  %v23 = vld [vmem:[%s0 + $0x39] sm:$0x1]
  %v24 = vld [vmem:[%s0 + $0x2] sm:$0x1]
  %v25 = vld [vmem:[%s0 + $0xa] sm:$0x1]
  %v26 = vld [vmem:[%s0 + $0x12] sm:$0x1]
  %v27 = vld [vmem:[%s0 + $0x1a] sm:$0x1]
  %v28 = vld [vmem:[%s0 + $0x22] sm:$0x1]
  %v29 = vld [vmem:[%s0 + $0x2a] sm:$0x1]
  %v30 = vld [vmem:[%s0 + $0x32] sm:$0x1]
  %v31 = vld [vmem:[%s0 + $0x3a] sm:$0x1]
  %v32 = vld [vmem:[%s0 + $0x3] sm:$0x1]
  %v33 = vld [vmem:[%s0 + $0xb] sm:$0x1]
  %v34 = vld [vmem:[%s0 + $0x13] sm:$0x1]
  %v35 = vld [vmem:[%s0 + $0x1b] sm:$0x1]
  %v36 = vld [vmem:[%s0 + $0x23] sm:$0x1]
  %v37 = vld [vmem:[%s0 + $0x2b] sm:$0x1]
  %v38 = vld [vmem:[%s0 + $0x33] sm:$0x1]
  %v39 = vld [vmem:[%s0 + $0x3b] sm:$0x1]
  %v40 = vld [vmem:[%s0 + $0x4] sm:$0x1]
  %v41 = vld [vmem:[%s0 + $0xc] sm:$0x1]
  %v42 = vld [vmem:[%s0 + $0x14] sm:$0x1]
  %v43 = vld [vmem:[%s0 + $0x1c] sm:$0x1]
  %v44 = vld [vmem:[%s0 + $0x24] sm:$0x1]
  %v45 = vld [vmem:[%s0 + $0x2c] sm:$0x1]
  %v46 = vld [vmem:[%s0 + $0x34] sm:$0x1]
  %v47 = vld [vmem:[%s0 + $0x3c] sm:$0x1]
  %v48 = vmul.f32 %v8, %v8
  %v49 = vmul.f32 %v9, %v9
  %v50 = vmul.f32 %v10, %v10
  %v51 = vmul.f32 %v11, %v11
  %v52 = vmul.f32 %v12, %v12
  %v53 = vmul.f32 %v13, %v13
  %v54 = vmul.f32 %v14, %v14
  %v55 = vmul.f32 %v15, %v15
  %v56 = vmul.f32 %v16, %v16
  %v57 = vmul.f32 %v17, %v17
  %v58 = vmul.f32 %v18, %v18
  %v59 = vmul.f32 %v19, %v19
  %v60 = vmul.f32 %v20, %v20
  %v61 = vmul.f32 %v21, %v21
  %v62 = vmul.f32 %v22, %v22
  %v63 = vmul.f32 %v23, %v23
  %v64 = vadd.f32 %v48, %v56
  %v65 = vadd.f32 %v49, %v57
  %v66 = vadd.f32 %v50, %v58
  %v67 = vadd.f32 %v51, %v59
  %v68 = vadd.f32 %v52, %v60
  %v69 = vadd.f32 %v53, %v61
  %v70 = vadd.f32 %v54, %v62
  %v71 = vadd.f32 %v55, %v63
  %v72 = vmul.f32 %v24, %v24
  %v73 = vmul.f32 %v25, %v25
  %v74 = vmul.f32 %v26, %v26
  %v75 = vmul.f32 %v27, %v27
  %v76 = vmul.f32 %v28, %v28
  %v77 = vmul.f32 %v29, %v29
  %v78 = vmul.f32 %v30, %v30
  %v79 = vmul.f32 %v31, %v31
  %v80 = vadd.f32 %v64, %v72
  %v81 = vadd.f32 %v65, %v73
  %v82 = vadd.f32 %v66, %v74
  %v83 = vadd.f32 %v67, %v75
  %v84 = vadd.f32 %v68, %v76
  %v85 = vadd.f32 %v69, %v77
  %v86 = vadd.f32 %v70, %v78
  %v87 = vadd.f32 %v71, %v79
  %v88 = vmul.f32 %v32, %v32
  %v89 = vmul.f32 %v33, %v33
  %v90 = vmul.f32 %v34, %v34
  %v91 = vmul.f32 %v35, %v35
  %v92 = vmul.f32 %v36, %v36
  %v93 = vmul.f32 %v37, %v37
  %v94 = vmul.f32 %v38, %v38
  %v95 = vmul.f32 %v39, %v39
  %v96 = vadd.f32 %v80, %v88
  %v97 = vadd.f32 %v81, %v89
  %v98 = vadd.f32 %v82, %v90
  %v99 = vadd.f32 %v83, %v91
  %v100 = vadd.f32 %v84, %v92
  %v101 = vadd.f32 %v85, %v93
  %v102 = vadd.f32 %v86, %v94
  %v103 = vadd.f32 %v87, %v95
  %v104 = vmul.f32 %v40, %v40
  %v105 = vmul.f32 %v41, %v41
  %v106 = vmul.f32 %v42, %v42
  %v107 = vmul.f32 %v43, %v43
  %v108 = vmul.f32 %v44, %v44
  %v109 = vmul.f32 %v45, %v45
  %v110 = vmul.f32 %v46, %v46
  %v111 = vmul.f32 %v47, %v47
  %v112 = vadd.f32 %v96, %v104
  %v113 = vadd.f32 %v97, %v105
  %v114 = vadd.f32 %v98, %v106
  %v115 = vadd.f32 %v99, %v107
  %v116 = vadd.f32 %v100, %v108
  %v117 = vadd.f32 %v101, %v109
  %v118 = vadd.f32 %v102, %v110
  %v119 = vadd.f32 %v103, %v111
  %v120 = vmax.f32 %v112, 1e-24
  %v121 = vmax.f32 %v113, 1e-24
  %v122 = vmax.f32 %v114, 1e-24
  %v123 = vmax.f32 %v115, 1e-24
  %v124 = vmax.f32 %v116, 1e-24
  %v125 = vmax.f32 %v117, 1e-24
  %v126 = vmax.f32 %v118, 1e-24
  %v127 = vmax.f32 %v119, 1e-24
  %v128 = vrsqrt.pop %v120
  %v129 = vmul.f32 %v128, %v120
  %v130 = vmul.f32 %v129, %v128
  %v131 = vmul.f32 0.5, %v130
  %v132 = vsub.f32 1.5, %v131
  %v133 = vmul.f32 %v128, %v132
  %vm134 = vweird.f32 %v120
  %vm135 = vweird.f32 %v128
  %vm136 = vmor %vm134, %vm135
  %v137 = vsel %vm136, %v128, %v133
  %v138 = vrsqrt.pop %v121
  %v139 = vmul.f32 %v138, %v121
  %v140 = vmul.f32 %v139, %v138
  %v141 = vmul.f32 0.5, %v140
  %v142 = vsub.f32 1.5, %v141
  %v143 = vmul.f32 %v138, %v142
  %vm144 = vweird.f32 %v121
  %vm145 = vweird.f32 %v138
  %vm146 = vmor %vm144, %vm145
  %v147 = vsel %vm146, %v138, %v143
  %v148 = vrsqrt.pop %v122
  %v149 = vmul.f32 %v148, %v122
  %v150 = vmul.f32 %v149, %v148
  %v151 = vmul.f32 0.5, %v150
  %v152 = vsub.f32 1.5, %v151
  %v153 = vmul.f32 %v148, %v152
  %vm154 = vweird.f32 %v122
  %vm155 = vweird.f32 %v148
  %vm156 = vmor %vm154, %vm155
  %v157 = vsel %vm156, %v148, %v153
  %v158 = vrsqrt.pop %v123
  %v159 = vmul.f32 %v158, %v123
  %v160 = vmul.f32 %v159, %v158
  %v161 = vmul.f32 0.5, %v160
  %v162 = vsub.f32 1.5, %v161
  %v163 = vmul.f32 %v158, %v162
  %vm164 = vweird.f32 %v123
  %vm165 = vweird.f32 %v158
  %vm166 = vmor %vm164, %vm165
  %v167 = vsel %vm166, %v158, %v163
  %v168 = vrsqrt.pop %v124
  %v169 = vmul.f32 %v168, %v124
  %v170 = vmul.f32 %v169, %v168
  %v171 = vmul.f32 0.5, %v170
  %v172 = vsub.f32 1.5, %v171
  %v173 = vmul.f32 %v168, %v172
  %vm174 = vweird.f32 %v124
  %vm175 = vweird.f32 %v168
  %vm176 = vmor %vm174, %vm175
  %v177 = vsel %vm176, %v168, %v173
  %v178 = vrsqrt.pop %v125
  %v179 = vmul.f32 %v178, %v125
  %v180 = vmul.f32 %v179, %v178
  %v181 = vmul.f32 0.5, %v180
  %v182 = vsub.f32 1.5, %v181
  %v183 = vmul.f32 %v178, %v182
  %vm184 = vweird.f32 %v125
  %vm185 = vweird.f32 %v178
  %vm186 = vmor %vm184, %vm185
  %v187 = vsel %vm186, %v178, %v183
  %v188 = vrsqrt.pop %v126
  %v189 = vmul.f32 %v188, %v126
  %v190 = vmul.f32 %v189, %v188
  %v191 = vmul.f32 0.5, %v190
  %v192 = vsub.f32 1.5, %v191
  %v193 = vmul.f32 %v188, %v192
  %vm194 = vweird.f32 %v126
  %vm195 = vweird.f32 %v188
  %vm196 = vmor %vm194, %vm195
  %v197 = vsel %vm196, %v188, %v193
  %v198 = vrsqrt.pop %v127
  %v199 = vmul.f32 %v198, %v127
  %v200 = vmul.f32 %v199, %v198
  %v201 = vmul.f32 0.5, %v200
  %v202 = vsub.f32 1.5, %v201
  %v203 = vmul.f32 %v198, %v202
  %vm204 = vweird.f32 %v127
  %vm205 = vweird.f32 %v198
  %vm206 = vmor %vm204, %vm205
  %v207 = vsel %vm206, %v198, %v203
  %v208 = vmul.f32 %v8, %v137
  %v209 = vmul.f32 %v9, %v147
  %v210 = vmul.f32 %v10, %v157
  %v211 = vmul.f32 %v11, %v167
  %v212 = vmul.f32 %v12, %v177
  %v213 = vmul.f32 %v13, %v187
  %v214 = vmul.f32 %v14, %v197
  %v215 = vmul.f32 %v15, %v207
  %v216 = vmul.f32 %v208, 10.0
  %v217 = vmul.f32 %v209, 10.0
  %v218 = vmul.f32 %v210, 10.0
  %v219 = vmul.f32 %v211, 10.0
  %v220 = vmul.f32 %v212, 10.0
  %v221 = vmul.f32 %v213, 10.0
  %v222 = vmul.f32 %v214, 10.0
  %v223 = vmul.f32 %v215, 10.0
  %v224 = vlaneseq
  %v225 = vshrl.u32 %v224, 7
  %v226 = vlaneseq
  %v227 = vand.u32 %v226, 127
  %vm228 = vcmp.ne.s32.totalorder %v227, %v225
  %v237 = vrot.slane %v217, 7
  %vm238 = vcmask 1041409
  %v239 = vsel %vm238, %v237, %v216
  %v240 = vrot.slane %v218, 6
  %vm241 = vcmask 1042434
  %v242 = vsel %vm241, %v240, %v239
  %v243 = vrot.slane %v219, 5
  %vm244 = vcmask 1043459
  %v245 = vsel %vm244, %v243, %v242
  %v246 = vrot.slane %v220, 4
  %vm247 = vcmask 1044484
  %v248 = vsel %vm247, %v246, %v245
  %v249 = vrot.slane %v221, 3
  %vm250 = vcmask 1045509
  %v251 = vsel %vm250, %v249, %v248
  %v252 = vrot.slane %v222, 2
  %vm253 = vcmask 1046534
  %v254 = vsel %vm253, %v252, %v251
  %v255 = vrot.slane %v223, 1
  %vm256 = vcmask 1047559
  %v257 = vsel %vm256, %v255, %v254
  %v267 = vrot.slane %v209, 7
  %v268 = vsel %vm238, %v267, %v208
  %v269 = vrot.slane %v210, 6
  %v270 = vsel %vm241, %v269, %v268
  %v271 = vrot.slane %v211, 5
  %v272 = vsel %vm244, %v271, %v270
  %v273 = vrot.slane %v212, 4
  %v274 = vsel %vm247, %v273, %v272
  %v275 = vrot.slane %v213, 3
  %v276 = vsel %vm250, %v275, %v274
  %v277 = vrot.slane %v214, 2
  %v278 = vsel %vm253, %v277, %v276
  %v279 = vrot.slane %v215, 1
  %v280 = vsel %vm256, %v279, %v278
  %282 = vmatpush.xpose.msra.mxu0 0.0
  %283 = vmatpush.xpose.msra.mxu0 0.0
  %284 = vmatpush.xpose.msra.mxu0 0.0
  %285 = vmatpush.xpose.msra.mxu0 0.0
  %286 = vmatpush.xpose.msra.mxu0 0.0
  %287 = vmatpush.xpose.msra.mxu0 0.0
  %288 = vmatpush.xpose.msra.mxu0 0.0
  %289 = vmatpush.xpose.msra.mxu0 0.0
  %290 = vmatpush.xpose.msra.mxu0 0.0
  %291 = vmatpush.xpose.msra.mxu0 0.0
  %292 = vmatpush.xpose.msra.mxu0 0.0
  %293 = vmatpush.xpose.msra.mxu0 0.0
  %294 = vmatpush.xpose.msra.mxu0 0.0
  %295 = vmatpush.xpose.msra.mxu0 0.0
  %296 = vmatpush.xpose.msra.mxu0 0.0
  %297 = vmatpush.xpose.msra.mxu0 %v280
  %298 = vmatmul.f32.gmra.mxu0 %v257
  %v299 = vpop.f32.mrf.mxu0
  %v300 = vadd.f32 0.0, %v299
  %301 = vdwg.mxu0
  %vm302 = vcmp.eq.s32.totalorder %v225, 0
  %304 = vrot.lane.b32.xlu0 %v300, 1
  %v305 = vpop.permute.xlu0 %304
  %v307 = vsel %vm302, %v300, %v305
  %v308 = vsel %vm228, %v300, -inf
  %vm309 = vcmask 64512
  %v310 = vsel %vm309, %v308, -inf
  %311 = vmax.xlane.f32.xlu0 %v310
  %v312 = vpop.xlane.xlu0 %311
  %v313 = vsub.f32 -inf, %v312
  %v314 = vmul.f32 %v313, 1.442695
  %v315 = vpow.pop %v314
  %v316 = vmul.f32 %v315, 0.0
  %v317 = vsub.f32 %v308, %v312
  %v318 = vmul.f32 %v317, 1.442695
  %v319 = vpow.pop %v318
  %v320 = vsel %vm309, %v319, 0.0
  %321 = vadd.xlane.f32.xlu0 %v320
  %v322 = vpop.xlane.xlu0 %321
  %v323 = vadd.f32 %v316, %v322
  %v324 = vmul.f32 %v16, %v137
  %v325 = vmul.f32 %v17, %v147
  %v326 = vmul.f32 %v18, %v157
  %v327 = vmul.f32 %v19, %v167
  %v328 = vmul.f32 %v20, %v177
  %v329 = vmul.f32 %v21, %v187
  %v330 = vmul.f32 %v22, %v197
  %v331 = vmul.f32 %v23, %v207
  %v340 = vrot.slane %v325, 7
  %v341 = vsel %vm238, %v340, %v324
  %v342 = vrot.slane %v326, 6
  %v343 = vsel %vm241, %v342, %v341
  %v344 = vrot.slane %v327, 5
  %v345 = vsel %vm244, %v344, %v343
  %v346 = vrot.slane %v328, 4
  %v347 = vsel %vm247, %v346, %v345
  %v348 = vrot.slane %v329, 3
  %v349 = vsel %vm250, %v348, %v347
  %v350 = vrot.slane %v330, 2
  %v351 = vsel %vm253, %v350, %v349
  %v352 = vrot.slane %v331, 1
  %v353 = vsel %vm256, %v352, %v351
  %355 = vmatpush.xpose.msra.mxu0 0.0
  %356 = vmatpush.xpose.msra.mxu0 0.0
  %357 = vmatpush.xpose.msra.mxu0 0.0
  %358 = vmatpush.xpose.msra.mxu0 0.0
  %359 = vmatpush.xpose.msra.mxu0 0.0
  %360 = vmatpush.xpose.msra.mxu0 0.0
  %361 = vmatpush.xpose.msra.mxu0 0.0
  %362 = vmatpush.xpose.msra.mxu0 0.0
  %363 = vmatpush.xpose.msra.mxu0 0.0
  %364 = vmatpush.xpose.msra.mxu0 0.0
  %365 = vmatpush.xpose.msra.mxu0 0.0
  %366 = vmatpush.xpose.msra.mxu0 0.0
  %367 = vmatpush.xpose.msra.mxu0 0.0
  %368 = vmatpush.xpose.msra.mxu0 0.0
  %369 = vmatpush.xpose.msra.mxu0 0.0
  %370 = vmatpush.xpose.msra.mxu0 %v353
  %371 = vmatmul.f32.gmra.mxu0 %v257
  %v372 = vpop.f32.mrf.mxu0
  %v373 = vadd.f32 0.0, %v372
  %374 = vdwg.mxu0
  %v375 = vsel %vm228, %v373, -inf
  %v376 = vsel %vm309, %v375, -inf
  %377 = vmax.xlane.f32.xlu0 %v376
  %v378 = vpop.xlane.xlu0 %377
  %v379 = vmax.f32 %v312, %v378
  %v380 = vsub.f32 %v312, %v379
  %v381 = vmul.f32 %v380, 1.442695
  %v382 = vpow.pop %v381
  %v383 = vmul.f32 %v323, %v382
  %v384 = vsub.f32 %v375, %v379
  %v385 = vmul.f32 %v384, 1.442695
  %v386 = vpow.pop %v385
  %v387 = vsel %vm309, %v386, 0.0
  %388 = vadd.xlane.f32.xlu0 %v387
  %v389 = vpop.xlane.xlu0 %388
  %v390 = vadd.f32 %v383, %v389
  %v391 = vmul.f32 %v24, %v137
  %v392 = vmul.f32 %v25, %v147
  %v393 = vmul.f32 %v26, %v157
  %v394 = vmul.f32 %v27, %v167
  %v395 = vmul.f32 %v28, %v177
  %v396 = vmul.f32 %v29, %v187
  %v397 = vmul.f32 %v30, %v197
  %v398 = vmul.f32 %v31, %v207
  %v407 = vrot.slane %v392, 7
  %v408 = vsel %vm238, %v407, %v391
  %v409 = vrot.slane %v393, 6
  %v410 = vsel %vm241, %v409, %v408
  %v411 = vrot.slane %v394, 5
  %v412 = vsel %vm244, %v411, %v410
  %v413 = vrot.slane %v395, 4
  %v414 = vsel %vm247, %v413, %v412
  %v415 = vrot.slane %v396, 3
  %v416 = vsel %vm250, %v415, %v414
  %v417 = vrot.slane %v397, 2
  %v418 = vsel %vm253, %v417, %v416
  %v419 = vrot.slane %v398, 1
  %v420 = vsel %vm256, %v419, %v418
  %422 = vmatpush.xpose.msra.mxu0 0.0
  %423 = vmatpush.xpose.msra.mxu0 0.0
  %424 = vmatpush.xpose.msra.mxu0 0.0
  %425 = vmatpush.xpose.msra.mxu0 0.0
  %426 = vmatpush.xpose.msra.mxu0 0.0
  %427 = vmatpush.xpose.msra.mxu0 0.0
  %428 = vmatpush.xpose.msra.mxu0 0.0
  %429 = vmatpush.xpose.msra.mxu0 0.0
  %430 = vmatpush.xpose.msra.mxu0 0.0
  %431 = vmatpush.xpose.msra.mxu0 0.0
  %432 = vmatpush.xpose.msra.mxu0 0.0
  %433 = vmatpush.xpose.msra.mxu0 0.0
  %434 = vmatpush.xpose.msra.mxu0 0.0
  %435 = vmatpush.xpose.msra.mxu0 0.0
  %436 = vmatpush.xpose.msra.mxu0 0.0
  %437 = vmatpush.xpose.msra.mxu0 %v420
  %438 = vmatmul.f32.gmra.mxu0 %v257
  %v439 = vpop.f32.mrf.mxu0
  %v440 = vadd.f32 0.0, %v439
  %441 = vdwg.mxu0
  %v442 = vsel %vm228, %v440, -inf
  %v443 = vsel %vm309, %v442, -inf
  %444 = vmax.xlane.f32.xlu0 %v443
  %v445 = vpop.xlane.xlu0 %444
  %v446 = vmax.f32 %v379, %v445
  %v447 = vsub.f32 %v379, %v446
  %v448 = vmul.f32 %v447, 1.442695
  %v449 = vpow.pop %v448
  %v450 = vmul.f32 %v390, %v449
  %v451 = vsub.f32 %v442, %v446
  %v452 = vmul.f32 %v451, 1.442695
  %v453 = vpow.pop %v452
  %v454 = vsel %vm309, %v453, 0.0
  %455 = vadd.xlane.f32.xlu0 %v454
  %v456 = vpop.xlane.xlu0 %455
  %v457 = vadd.f32 %v450, %v456
  %v458 = vmul.f32 %v32, %v137
  %v459 = vmul.f32 %v33, %v147
  %v460 = vmul.f32 %v34, %v157
  %v461 = vmul.f32 %v35, %v167
  %v462 = vmul.f32 %v36, %v177
  %v463 = vmul.f32 %v37, %v187
  %v464 = vmul.f32 %v38, %v197
  %v465 = vmul.f32 %v39, %v207
  %v474 = vrot.slane %v459, 7
  %v475 = vsel %vm238, %v474, %v458
  %v476 = vrot.slane %v460, 6
  %v477 = vsel %vm241, %v476, %v475
  %v478 = vrot.slane %v461, 5
  %v479 = vsel %vm244, %v478, %v477
  %v480 = vrot.slane %v462, 4
  %v481 = vsel %vm247, %v480, %v479
  %v482 = vrot.slane %v463, 3
  %v483 = vsel %vm250, %v482, %v481
  %v484 = vrot.slane %v464, 2
  %v485 = vsel %vm253, %v484, %v483
  %v486 = vrot.slane %v465, 1
  %v487 = vsel %vm256, %v486, %v485
  %489 = vmatpush.xpose.msra.mxu0 0.0
  %490 = vmatpush.xpose.msra.mxu0 0.0
  %491 = vmatpush.xpose.msra.mxu0 0.0
  %492 = vmatpush.xpose.msra.mxu0 0.0
  %493 = vmatpush.xpose.msra.mxu0 0.0
  %494 = vmatpush.xpose.msra.mxu0 0.0
  %495 = vmatpush.xpose.msra.mxu0 0.0
  %496 = vmatpush.xpose.msra.mxu0 0.0
  %497 = vmatpush.xpose.msra.mxu0 0.0
  %498 = vmatpush.xpose.msra.mxu0 0.0
  %499 = vmatpush.xpose.msra.mxu0 0.0
  %500 = vmatpush.xpose.msra.mxu0 0.0
  %501 = vmatpush.xpose.msra.mxu0 0.0
  %502 = vmatpush.xpose.msra.mxu0 0.0
  %503 = vmatpush.xpose.msra.mxu0 0.0
  %504 = vmatpush.xpose.msra.mxu0 %v487
  %505 = vmatmul.f32.gmra.mxu0 %v257
  %v506 = vpop.f32.mrf.mxu0
  %v507 = vadd.f32 0.0, %v506
  %508 = vdwg.mxu0
  %v509 = vsel %vm228, %v507, -inf
  %v510 = vsel %vm309, %v509, -inf
  %511 = vmax.xlane.f32.xlu0 %v510
  %v512 = vpop.xlane.xlu0 %511
  %v513 = vmax.f32 %v446, %v512
  %v514 = vsub.f32 %v446, %v513
  %v515 = vmul.f32 %v514, 1.442695
  %v516 = vpow.pop %v515
  %v517 = vmul.f32 %v457, %v516
  %v518 = vsub.f32 %v509, %v513
  %v519 = vmul.f32 %v518, 1.442695
  %v520 = vpow.pop %v519
  %v521 = vsel %vm309, %v520, 0.0
  %522 = vadd.xlane.f32.xlu0 %v521
  %v523 = vpop.xlane.xlu0 %522
  %v524 = vadd.f32 %v517, %v523
  %v525 = vmul.f32 %v40, %v137
  %v526 = vmul.f32 %v41, %v147
  %v527 = vmul.f32 %v42, %v157
  %v528 = vmul.f32 %v43, %v167
  %v529 = vmul.f32 %v44, %v177
  %v530 = vmul.f32 %v45, %v187
  %v531 = vmul.f32 %v46, %v197
  %v532 = vmul.f32 %v47, %v207
  %v541 = vrot.slane %v526, 7
  %v542 = vsel %vm238, %v541, %v525
  %v543 = vrot.slane %v527, 6
  %v544 = vsel %vm241, %v543, %v542
  %v545 = vrot.slane %v528, 5
  %v546 = vsel %vm244, %v545, %v544
  %v547 = vrot.slane %v529, 4
  %v548 = vsel %vm247, %v547, %v546
  %v549 = vrot.slane %v530, 3
  %v550 = vsel %vm250, %v549, %v548
  %v551 = vrot.slane %v531, 2
  %v552 = vsel %vm253, %v551, %v550
  %v553 = vrot.slane %v532, 1
  %v554 = vsel %vm256, %v553, %v552
  %556 = vmatpush.xpose.msra.mxu0 0.0
  %557 = vmatpush.xpose.msra.mxu0 0.0
  %558 = vmatpush.xpose.msra.mxu0 0.0
  %559 = vmatpush.xpose.msra.mxu0 0.0
  %560 = vmatpush.xpose.msra.mxu0 0.0
  %561 = vmatpush.xpose.msra.mxu0 0.0
  %562 = vmatpush.xpose.msra.mxu0 0.0
  %563 = vmatpush.xpose.msra.mxu0 0.0
  %564 = vmatpush.xpose.msra.mxu0 0.0
  %565 = vmatpush.xpose.msra.mxu0 0.0
  %566 = vmatpush.xpose.msra.mxu0 0.0
  %567 = vmatpush.xpose.msra.mxu0 0.0
  %568 = vmatpush.xpose.msra.mxu0 0.0
  %569 = vmatpush.xpose.msra.mxu0 0.0
  %570 = vmatpush.xpose.msra.mxu0 0.0
  %571 = vmatpush.xpose.msra.mxu0 %v554
  %572 = vmatmul.f32.gmra.mxu0 %v257
  %v573 = vpop.f32.mrf.mxu0
  %v574 = vadd.f32 0.0, %v573
  %575 = vdwg.mxu0
  %v576 = vsel %vm228, %v574, -inf
  %v577 = vsel %vm309, %v576, -inf
  %578 = vmax.xlane.f32.xlu0 %v577
  %v579 = vpop.xlane.xlu0 %578
  %v580 = vmax.f32 %v513, %v579
  %v581 = vsub.f32 %v513, %v580
  %v582 = vmul.f32 %v581, 1.442695
  %v583 = vpow.pop %v582
  %v584 = vmul.f32 %v524, %v583
  %v585 = vsub.f32 %v576, %v580
  %v586 = vmul.f32 %v585, 1.442695
  %v587 = vpow.pop %v586
  %v588 = vsel %vm309, %v587, 0.0
  %589 = vadd.xlane.f32.xlu0 %v588
  %v590 = vpop.xlane.xlu0 %589
  %v591 = vadd.f32 %v584, %v590
  %v592 = vlog2.pop %v591
  %v593 = vmul.f32 %v592, 0.6931472
  %v594 = vadd.f32 %v580, %v593
  %v595 = vsub.f32 %v594, %v307
  %597 = vrot.lane.b32.xlu0 %v595, 127
  %v598 = vpop.permute.xlu0 %597
  %vm600 = vcmask 7168
  %601 = vst.msk [vmem:[%s1] sm:$0xff] %vm600, %v598
  // Predicated region
  $region6: #{info_nce_loss_pallas.1} parent=0 // pred_check
    _
  $region7: #{info_nce_loss_pallas.1} parent=0 // pred_check_branch
    %603 = sbr.rel (0) target = $region9
  $region8: #{info_nce_loss_pallas.1} parent=0 // pred_region
    _
  $region9: #{info_nce_loss_pallas.1} parent=0 // pred_fallthru
    _
  // Predicated region
  $region10: #{info_nce_loss_pallas.1} parent=0 // pred_check
    _
  $region11: #{info_nce_loss_pallas.1} parent=0 // pred_check_branch
    %605 = sbr.rel (0) target = $region13
  $region12: #{info_nce_loss_pallas.1} parent=0 // pred_region
    _
  $region13: #{info_nce_loss_pallas.1} parent=0 // pred_fallthru
    _

</llo_original>
